<compile_context>
chip_gen: v5e
topology: v5e:2x2
jax: 0.10.0
libtpu: 0.0.40
codegen_flags: <defaults>
</compile_context>

<pallas_src>
import functools

import jax
import jax.numpy as jnp
from jax import lax
from jax.experimental import pallas as pl
from jax.experimental.pallas import tpu as pltpu


# ----------------------------- Pallas kernel ------------------------------ #
def _backbone_kernel(x_ref, wband_ref, cb_ref, pool_ref, fcw_ref, fcb_ref,
                     out_ref, *, ncls):
  """One batch block per grid step.

  x_ref    : (b_blk*Hp + 16, Wp*C)  bf16 padded image rows (+16 zero rows)
  wband_ref: (3, Wp*C, W*F)         bf16 banded conv weights (one per row tap)
  cb_ref   : (1, W*F)               f32 conv bias tiled over W
  pool_ref : (b_blk, b_blk*Hp)      bf16 pooling-row matrix (1/(H*W) on valid rows)
  fcw_ref  : (W*F, NCLS_PAD)        bf16 fc weight tiled over W (zero padded cols)
  fcb_ref  : (1, NCLS_PAD)          f32 fc bias (zero padded lanes)
  out_ref  : (b_blk, NCLS_PAD)      f32 log-probabilities (padded lanes garbage)
  """
  l_out = pool_ref.shape[1]                     # b_blk * Hp (static)
  wf = wband_ref.shape[2]                       # W * F

  # Load the block once; upcast so the +1/+2 row-shifted slices relayout on f32.
  x = x_ref[...].astype(jnp.float32)            # (l_out + 16, Wp*C)

  # 3x3 conv stem = 3 accumulating row-shifted banded matmuls (no im2col).
  # Output h is lane-dense: (l_out, W*F). bf16 MXU operands, f32 accumulation.
  acc = jnp.dot(x[0:l_out, :].astype(jnp.bfloat16), wband_ref[0],
                preferred_element_type=jnp.float32)
  acc = acc + jnp.dot(x[1:l_out + 1, :].astype(jnp.bfloat16), wband_ref[1],
                      preferred_element_type=jnp.float32)
  acc = acc + jnp.dot(x[2:l_out + 2, :].astype(jnp.bfloat16), wband_ref[2],
                      preferred_element_type=jnp.float32)

  # bias + ReLU (f32 VPU, lane-dense)
  hact = jnp.maximum(acc + cb_ref[...], 0.0)

  # fused global-average-pool + fc:  logits = pool_rows @ h @ fc_big + fc_b
  # (pooling over valid image rows via the precomputed bf16 pool matrix; the
  #  per-w structure of h is absorbed by the w-tiled fc weight).
  t = jnp.dot(pool_ref[...], hact.astype(jnp.bfloat16),
              preferred_element_type=jnp.float32)          # (b_blk, W*F)
  logits = jnp.dot(t.astype(jnp.bfloat16), fcw_ref[...],
                   preferred_element_type=jnp.float32)      # (b_blk, NCLS_PAD)
  logits = logits + fcb_ref[...]

  # mask padded class lanes explicitly, then log_softmax along dim=-1
  lane = lax.broadcasted_iota(jnp.int32, logits.shape, 1)
  logits = jnp.where(lane < ncls, logits, -1e30)
  m = jnp.max(logits, axis=-1, keepdims=True)
  shifted = logits - m
  lse = jnp.log(jnp.sum(jnp.exp(shifted), axis=-1, keepdims=True))
  out_ref[...] = shifted - lse


# ------------------------------- wrapper ----------------------------------- #
@functools.partial(jax.jit, static_argnames=("block_b",))
def model_forward(x_nchw, conv_w, conv_b, fc_w, fc_b, *, block_b=64):
  """x_nchw: (N, C, H, W) float32.  Returns (N, nclass) log-probabilities."""
  n, c, h, w = x_nchw.shape
  f = conv_w.shape[0]                 # PyTorch conv weight (F, C, 3, 3)
  kh, kw = conv_w.shape[2], conv_w.shape[3]
  assert (kh, kw) == (3, 3), "stem stand-in assumes a 3x3 conv"
  ncls = fc_w.shape[0]                # PyTorch linear weight (ncls, F)
  hp, wp = h + 2, w + 2               # spatially padded sizes (padding=1)
  kcols = wp * c                      # columns of a flattened padded image row
  wf = w * f                          # lane-dense intermediate width
  ncls_pad = pl.cdiv(ncls, 128) * 128
  extra = 16                          # zero rows per block so shifted taps stay in-bounds

  # batch block: multiple of 8 (unmasked stores), capped so grid >= 2 when n > 8
  block_b = max(8, (block_b // 8) * 8)
  b_blk = min(block_b, pl.cdiv(pl.cdiv(n, 2), 8) * 8)
  n_pad = pl.cdiv(n, b_blk) * b_blk
  num_blocks = n_pad // b_blk
  l_out = b_blk * hp
  x_rows_blk = l_out + extra

  # ---- glue: one cheap XLA pass (NCHW->NHWC, spatial pad, row flatten) ------
  x_nhwc = jnp.transpose(x_nchw, (0, 2, 3, 1))
  x_pad = jnp.pad(x_nhwc, ((0, n_pad - n), (1, 1), (1, 1), (0, 0)))
  x2d = x_pad.reshape(num_blocks, b_blk * hp, kcols)
  x2d = jnp.pad(x2d, ((0, 0), (0, extra), (0, 0)))
  x2d = x2d.reshape(num_blocks * x_rows_blk, kcols).astype(jnp.bfloat16)

  # ---- banded per-row-tap conv weights: wband[di, j*C+c, w*F+f] ------------
  #      = conv_w[f, c, di, j-w] when 0 <= j-w <= 2 else 0
  w_t = jnp.transpose(conv_w, (2, 3, 1, 0))                       # (3, 3, C, F)
  j_minus_w = jnp.arange(wp)[None, :] - jnp.arange(w)[:, None]    # (W, Wp)
  valid = (j_minus_w >= 0) & (j_minus_w <= 2)
  band = w_t[:, jnp.clip(j_minus_w, 0, 2)]                        # (3, W, Wp, C, F)
  band = band * valid[None, :, :, None, None].astype(band.dtype)
  wband = jnp.transpose(band, (0, 2, 3, 1, 4)).reshape(3, kcols, wf)
  wband = wband.astype(jnp.bfloat16)

  cb_tiled = jnp.tile(conv_b.astype(jnp.float32), w).reshape(1, wf)

  # ---- pooling-row matrix (bf16, VMEM-resident; no per-step iota build) ----
  o = jnp.arange(l_out)
  sel = (o[None, :] // hp == jnp.arange(b_blk)[:, None]) & ((o[None, :] % hp) < h)
  pool_rows = jnp.where(sel, 1.0 / (h * w), 0.0).astype(jnp.bfloat16)

  # ---- fc weight tiled over W + padded to 128 lanes ------------------------
  fc_w_mat = jnp.pad(fc_w.astype(jnp.float32).T, ((0, 0), (0, ncls_pad - ncls)))
  fc_big = jnp.tile(fc_w_mat, (w, 1)).astype(jnp.bfloat16)        # (W*F, NCLS_PAD)
  fcb_pad = jnp.pad(fc_b.astype(jnp.float32),
                    (0, ncls_pad - ncls)).reshape(1, ncls_pad)

  grid_spec = pltpu.PrefetchScalarGridSpec(
      num_scalar_prefetch=0,
      grid=(num_blocks,),
      in_specs=[
          pl.BlockSpec((x_rows_blk, kcols), lambda b: (b, 0)),   # image rows
          pl.BlockSpec((3, kcols, wf), lambda b: (0, 0, 0)),     # banded conv w
          pl.BlockSpec((1, wf), lambda b: (0, 0)),               # conv bias
          pl.BlockSpec((b_blk, l_out), lambda b: (0, 0)),        # pooling rows
          pl.BlockSpec((wf, ncls_pad), lambda b: (0, 0)),        # fc weight
          pl.BlockSpec((1, ncls_pad), lambda b: (0, 0)),         # fc bias
      ],
      out_specs=pl.BlockSpec((b_blk, ncls_pad), lambda b: (b, 0)),
  )

  flops = num_blocks * (2 * 3 * l_out * kcols * wf       # conv taps
                        + 2 * b_blk * l_out * wf         # pooling matmul
                        + 2 * b_blk * wf * ncls_pad)     # fc
  bytes_accessed = (x2d.size * 2 + wband.size * 2 + cb_tiled.size * 4
                    + pool_rows.size * 2 + fc_big.size * 2 + fcb_pad.size * 4
                    + n_pad * ncls_pad * 4)
  cost = pl.CostEstimate(flops=flops, transcendentals=n_pad * ncls_pad,
                         bytes_accessed=bytes_accessed)

  out_pad = pl.pallas_call(
      functools.partial(_backbone_kernel, ncls=ncls),
      out_shape=jax.ShapeDtypeStruct((n_pad, ncls_pad), jnp.float32),
      grid_spec=grid_spec,
      compiler_params=pltpu.CompilerParams(
          dimension_semantics=("parallel",),
          # working set is a few MiB; 32 MiB is above the v5e 16 MiB scoped
          # default and within v7x's 64 MiB physical VMEM.
          vmem_limit_bytes=32 * 1024 * 1024),
      cost_estimate=cost,
  )(x2d, wband, cb_tiled, pool_rows, fc_big, fcb_pad)

  return out_pad[:n, :ncls]


# ------------------------- pure-JAX reference ------------------------------ #
def _reference_forward(x_nchw, conv_w, conv_b, fc_w, fc_b):
  n, c, h, w = x_nchw.shape
  x = jnp.transpose(x_nchw, (0, 2, 3, 1))
  xp = jnp.pad(x, ((0, 0), (1, 1), (1, 1), (0, 0)))
  cols = [xp[:, i:i + h, j:j + w, :] for i in range(3) for j in range(3)]
  pat = jnp.stack(cols, axis=3)                             # (N, H, W, 9, C)
  wt = jnp.transpose(conv_w, (2, 3, 1, 0)).reshape(9, c, conv_w.shape[0])
  hh = jnp.einsum('nhwkc,kcf->nhwf', pat, wt) + conv_b
  hh = jnp.maximum(hh, 0.0)
  pooled = hh.mean(axis=(1, 2))
  logits = pooled @ fc_w.T + fc_b
  return jax.nn.log_softmax(logits, axis=-1)


# ------------------------------- main -------------------------------------- #
if __name__ == "__main__":
  # small shapes consistent with an image classifier forward
  N, C, H, W = 2, 4, 16, 16
  F = 16          # stem conv output channels
  NCLASS = 10     # replaced fc out_features (nclass)

  key = jax.random.PRNGKey(0)
  k_x, k_cw, k_cb, k_fw, k_fb = jax.random.split(key, 5)

  x = jax.random.normal(k_x, (N, C, H, W), dtype=jnp.float32)
  # deterministic synthetic params (PyTorch shape conventions)
  conv_w = 0.1 * jax.random.normal(k_cw, (F, C, 3, 3), dtype=jnp.float32)
  conv_b = 0.1 * jax.random.normal(k_cb, (F,), dtype=jnp.float32)
  fc_w = 0.1 * jax.random.normal(k_fw, (NCLASS, F), dtype=jnp.float32)
  fc_b = 0.1 * jax.random.normal(k_fb, (NCLASS,), dtype=jnp.float32)

  out = model_forward(x, conv_w, conv_b, fc_w, fc_b)
  out = jax.block_until_ready(out)

  ref = _reference_forward(x, conv_w, conv_b, fc_w, fc_b)

  assert out.shape == (N, NCLASS)
  row_sums = jnp.sum(jnp.exp(out), axis=-1)
  assert bool(jnp.all(jnp.abs(row_sums - 1.0) < 1e-3))
  assert bool(jnp.all(jnp.isfinite(out)))
  # bf16 MXU operands with f32 accumulation -> small drift vs f32 reference
  assert bool(jnp.all(jnp.abs(out - ref) < 5e-2))

  # TODO(synk): arbitrary torchvision backbone selection / pretrained weights /
  # DataParallel have no Pallas equivalent; a 1-conv mini ResNet stem stands in.
  print("KERNEL_OK")
</pallas_src>

<mosaic_0001>
module attributes {stable_mosaic.version = 11 : i64} {
  func.func @_backbone_kernel(%arg0: i32, %arg1: memref<160x72xbf16, #tpu.memory_space<vmem>>, %arg2: memref<3x72x256xbf16, #tpu.memory_space<vmem>>, %arg3: memref<1x256xf32, #tpu.memory_space<vmem>>, %arg4: memref<8x144xbf16, #tpu.memory_space<vmem>>, %arg5: memref<256x128xbf16, #tpu.memory_space<vmem>>, %arg6: memref<1x128xf32, #tpu.memory_space<vmem>>, %arg7: memref<8x128xf32, #tpu.memory_space<vmem>>) attributes {dimension_semantics = [#tpu.dimension_semantics<parallel>], iteration_bounds = array<i64: 1>, scalar_prefetch = 0 : i64, scratch_operands = 0 : i64, tpu.core_type = #tpu.core_type<tc>, window_params = [{transform_indices = @transform_0, window_bounds = array<i64: 160, 72>}, {pipeline_mode = #tpu.pipeline_mode<synchronous>, transform_indices = @transform_1, window_bounds = array<i64: 3, 72, 256>}, {pipeline_mode = #tpu.pipeline_mode<synchronous>, transform_indices = @transform_2, window_bounds = array<i64: 1, 256>}, {pipeline_mode = #tpu.pipeline_mode<synchronous>, transform_indices = @transform_3, window_bounds = array<i64: 8, 144>}, {pipeline_mode = #tpu.pipeline_mode<synchronous>, transform_indices = @transform_4, window_bounds = array<i64: 256, 128>}, {pipeline_mode = #tpu.pipeline_mode<synchronous>, transform_indices = @transform_5, window_bounds = array<i64: 1, 128>}, {transform_indices = @transform_6, window_bounds = array<i64: 8, 128>}]} {
    %c0 = arith.constant 0 : index
    %c0_0 = arith.constant 0 : index
    %0 = vector.load %arg1[%c0, %c0_0] : memref<160x72xbf16, #tpu.memory_space<vmem>>, vector<160x72xbf16>
    %1 = arith.extf %0 : vector<160x72xbf16> to vector<160x72xf32>
    %2 = vector.extract_strided_slice %1 {offsets = [0, 0], sizes = [144, 72], strides = [1, 1]} : vector<160x72xf32> to vector<144x72xf32>
    %3 = arith.truncf %2 : vector<144x72xf32> to vector<144x72xbf16>
    %c0_1 = arith.constant 0 : index
    %c0_2 = arith.constant 0 : index
    %c0_3 = arith.constant 0 : index
    %4 = vector.load %arg2[%c0_1, %c0_2, %c0_3] : memref<3x72x256xbf16, #tpu.memory_space<vmem>>, vector<1x72x256xbf16>
    %5 = vector.shape_cast %4 : vector<1x72x256xbf16> to vector<72x256xbf16>
    %cst = arith.constant dense<0.000000e+00> : vector<144x256xf32>
    %6 = tpu.matmul %3, %5, %cst {dimension_numbers = #tpu.dot_dimension_numbers<[1], [0], [0], [1], [0, 0, 1, 1], [], []>} : vector<144x72xbf16>, vector<72x256xbf16>, vector<144x256xf32> -> vector<144x256xf32>
    %7 = vector.extract_strided_slice %1 {offsets = [1, 0], sizes = [144, 72], strides = [1, 1]} : vector<160x72xf32> to vector<144x72xf32>
    %8 = arith.truncf %7 : vector<144x72xf32> to vector<144x72xbf16>
    %c1 = arith.constant 1 : index
    %c0_4 = arith.constant 0 : index
    %c0_5 = arith.constant 0 : index
    %9 = vector.load %arg2[%c1, %c0_4, %c0_5] : memref<3x72x256xbf16, #tpu.memory_space<vmem>>, vector<1x72x256xbf16>
    %10 = vector.shape_cast %9 : vector<1x72x256xbf16> to vector<72x256xbf16>
    %cst_6 = arith.constant dense<0.000000e+00> : vector<144x256xf32>
    %11 = tpu.matmul %8, %10, %cst_6 {dimension_numbers = #tpu.dot_dimension_numbers<[1], [0], [0], [1], [0, 0, 1, 1], [], []>} : vector<144x72xbf16>, vector<72x256xbf16>, vector<144x256xf32> -> vector<144x256xf32>
    %12 = arith.addf %6, %11 : vector<144x256xf32>
    %13 = vector.extract_strided_slice %1 {offsets = [2, 0], sizes = [144, 72], strides = [1, 1]} : vector<160x72xf32> to vector<144x72xf32>
    %14 = arith.truncf %13 : vector<144x72xf32> to vector<144x72xbf16>
    %c2 = arith.constant 2 : index
    %c0_7 = arith.constant 0 : index
    %c0_8 = arith.constant 0 : index
    %15 = vector.load %arg2[%c2, %c0_7, %c0_8] : memref<3x72x256xbf16, #tpu.memory_space<vmem>>, vector<1x72x256xbf16>
    %16 = vector.shape_cast %15 : vector<1x72x256xbf16> to vector<72x256xbf16>
    %cst_9 = arith.constant dense<0.000000e+00> : vector<144x256xf32>
    %17 = tpu.matmul %14, %16, %cst_9 {dimension_numbers = #tpu.dot_dimension_numbers<[1], [0], [0], [1], [0, 0, 1, 1], [], []>} : vector<144x72xbf16>, vector<72x256xbf16>, vector<144x256xf32> -> vector<144x256xf32>
    %18 = arith.addf %12, %17 : vector<144x256xf32>
    %c0_10 = arith.constant 0 : index
    %c0_11 = arith.constant 0 : index
    %19 = vector.load %arg3[%c0_10, %c0_11] : memref<1x256xf32, #tpu.memory_space<vmem>>, vector<1x256xf32>
    %20 = vector.broadcast %19 : vector<1x256xf32> to vector<144x256xf32>
    %21 = arith.addf %18, %20 : vector<144x256xf32>
    %cst_12 = arith.constant 0.000000e+00 : f32
    %22 = vector.broadcast %cst_12 : f32 to vector<144x256xf32>
    %23 = arith.maximumf %21, %22 : vector<144x256xf32>
    %c0_13 = arith.constant 0 : index
    %c0_14 = arith.constant 0 : index
    %24 = vector.load %arg4[%c0_13, %c0_14] : memref<8x144xbf16, #tpu.memory_space<vmem>>, vector<8x144xbf16>
    %25 = arith.truncf %23 : vector<144x256xf32> to vector<144x256xbf16>
    %cst_15 = arith.constant dense<0.000000e+00> : vector<8x256xf32>
    %26 = tpu.matmul %24, %25, %cst_15 {dimension_numbers = #tpu.dot_dimension_numbers<[1], [0], [0], [1], [0, 0, 1, 1], [], []>} : vector<8x144xbf16>, vector<144x256xbf16>, vector<8x256xf32> -> vector<8x256xf32>
    %27 = arith.truncf %26 : vector<8x256xf32> to vector<8x256xbf16>
    %c0_16 = arith.constant 0 : index
    %c0_17 = arith.constant 0 : index
    %28 = vector.load %arg5[%c0_16, %c0_17] : memref<256x128xbf16, #tpu.memory_space<vmem>>, vector<256x128xbf16>
    %cst_18 = arith.constant dense<0.000000e+00> : vector<8x128xf32>
    %29 = tpu.matmul %27, %28, %cst_18 {dimension_numbers = #tpu.dot_dimension_numbers<[1], [0], [0], [1], [0, 0, 1, 1], [], []>} : vector<8x256xbf16>, vector<256x128xbf16>, vector<8x128xf32> -> vector<8x128xf32>
    %c0_19 = arith.constant 0 : index
    %c0_20 = arith.constant 0 : index
    %30 = vector.load %arg6[%c0_19, %c0_20] : memref<1x128xf32, #tpu.memory_space<vmem>>, vector<1x128xf32>
    %31 = vector.broadcast %30 : vector<1x128xf32> to vector<8x128xf32>
    %32 = arith.addf %29, %31 : vector<8x128xf32>
    %33 = tpu.iota {dimensions = array<i32: 1>} : vector<8x128xi32>
    %c10_i32 = arith.constant 10 : i32
    %34 = vector.broadcast %c10_i32 : i32 to vector<8x128xi32>
    %35 = arith.cmpi slt, %33, %34 : vector<8x128xi32>
    %cst_21 = arith.constant -1.000000e+30 : f32
    %36 = vector.broadcast %cst_21 : f32 to vector<8x128xf32>
    %37 = arith.select %35, %32, %36 : vector<8x128xi1>, vector<8x128xf32>
    %cst_22 = arith.constant dense<0xFF800000> : vector<8xf32>
    %38 = vector.multi_reduction <maximumf>, %37, %cst_22 [1] : vector<8x128xf32> to vector<8xf32>
    %39 = vector.shape_cast %38 : vector<8xf32> to vector<8x1xf32>
    %40 = vector.broadcast %39 : vector<8x1xf32> to vector<8x128xf32>
    %41 = arith.subf %37, %40 : vector<8x128xf32>
    %42 = math.exp %41 : vector<8x128xf32>
    %cst_23 = arith.constant dense<0.000000e+00> : vector<8xf32>
    %43 = vector.multi_reduction <add>, %42, %cst_23 [1] : vector<8x128xf32> to vector<8xf32>
    %44 = vector.shape_cast %43 : vector<8xf32> to vector<8x1xf32>
    %45 = math.log %44 : vector<8x1xf32>
    %46 = vector.broadcast %45 : vector<8x1xf32> to vector<8x128xf32>
    %47 = arith.subf %41, %46 : vector<8x128xf32>
    %c0_24 = arith.constant 0 : index
    %c0_25 = arith.constant 0 : index
    %48 = vector.load %arg7[%c0_24, %c0_25] : memref<8x128xf32, #tpu.memory_space<vmem>>, vector<8x128xf32>
    tpu.vector_store %arg7[%c0_24, %c0_25], %47 {strides = array<i32>} : memref<8x128xf32, #tpu.memory_space<vmem>>, vector<8x128xf32>,
    return
  }
  func.func @transform_0(%arg0: i32) -> (i32, i32) {
    %c0_i32 = arith.constant 0 : i32
    %c0_i32_0 = arith.constant 0 : i32
    return %arg0, %c0_i32 : i32, i32
  }
  func.func @transform_1(%arg0: i32) -> (i32, i32, i32) {
    %c0_i32 = arith.constant 0 : i32
    %c0_i32_0 = arith.constant 0 : i32
    %c0_i32_1 = arith.constant 0 : i32
    %c0_i32_2 = arith.constant 0 : i32
    return %c0_i32, %c0_i32_0, %c0_i32_1 : i32, i32, i32
  }
  func.func @transform_2(%arg0: i32) -> (i32, i32) {
    %c0_i32 = arith.constant 0 : i32
    %c0_i32_0 = arith.constant 0 : i32
    %c0_i32_1 = arith.constant 0 : i32
    return %c0_i32, %c0_i32_0 : i32, i32
  }
  func.func @transform_3(%arg0: i32) -> (i32, i32) {
    %c0_i32 = arith.constant 0 : i32
    %c0_i32_0 = arith.constant 0 : i32
    %c0_i32_1 = arith.constant 0 : i32
    return %c0_i32, %c0_i32_0 : i32, i32
  }
  func.func @transform_4(%arg0: i32) -> (i32, i32) {
    %c0_i32 = arith.constant 0 : i32
    %c0_i32_0 = arith.constant 0 : i32
    %c0_i32_1 = arith.constant 0 : i32
    return %c0_i32, %c0_i32_0 : i32, i32
  }
  func.func @transform_5(%arg0: i32) -> (i32, i32) {
    %c0_i32 = arith.constant 0 : i32
    %c0_i32_0 = arith.constant 0 : i32
    %c0_i32_1 = arith.constant 0 : i32
    return %c0_i32, %c0_i32_0 : i32, i32
  }
  func.func @transform_6(%arg0: i32) -> (i32, i32) {
    %c0_i32 = arith.constant 0 : i32
    %c0_i32_0 = arith.constant 0 : i32
    return %arg0, %c0_i32 : i32, i32
  }
}

</mosaic_0001>

<llo_original>
// kernel: tile.13
$region0: #{tile.13}
  #allocation0 [shape = 's32[1]{0}', space=sflag, size = 0x4, scoped, tag = 'scoped memory for tile.13']
  %s0 = inlined_call_operand.vmem [shape: f32[16], index: 0, kind: input, shape index: {}]
  %s1 = inlined_call_operand.vmem [shape: f32[16,16], index: 1, kind: output, shape index: {}]
  // Predicated region
  $region2: #{tile.13} parent=0 // pred_check
    _
  $region3: #{tile.13} parent=0 // pred_check_branch
    %3 = sbr.rel (0) target = $region5
  $region4: #{tile.13} parent=0 // pred_region
    _
  $region5: #{tile.13} parent=0 // pred_fallthru
    _
  %v4 = vld [vmem:[%s0] ss:$0 sm:$0xff]
  %5 = vst [vmem:[%s1] sm:$0xff] %v4
  %s6 = scalar_lea.vmem %s1, 8
  %7 = vst [vmem:[%s6] sm:$0xff] %v4

// kernel: tile.14
$region0: #{tile.14}
  %s0 = inlined_call_operand.vmem [shape: f32[16,16], index: 0, kind: input, shape index: {}]
  %s1 = inlined_call_operand.vmem [shape: f32[1,256], index: 1, kind: output, shape index: {}]
  $region1: #{tile.14} parent=0
    #allocation0 [shape = 'u8[8192]{0}', space=vmem, size = 0x2000, scoped, tag = 'scoped mem for output reshape']
    %s2 = smov 3
    %v3 = vld [vmem:[%s0] ss:$8 sm:%s2]
    %vm4 = vcmask 130048
    %5 = vst.msk [vmem:[#allocation0] ss:$8 sm:$0x3] %vm4, %v3
    %s6 = scalar_lea.vmem %s0, 7
    %s7 = smov 3
    %v8 = vld [vmem:[%s6] ss:$8 sm:%s7]
    %9 = vrot.lane.b32.xlu0 %v8, 112
    %v10 = vpop.permute.xlu0 %9
    %vm11 = vcmask 1048448
    %12 = vst.msk [vmem:[#allocation0] ss:$8 sm:$0x3] %vm11, %v10
    %s13 = scalar_lea.vmem %s0, 6
    %s14 = smov 3
    %v15 = vld [vmem:[%s13] ss:$8 sm:%s14]
    %16 = vrot.lane.b32.xlu0 %v15, 96
    %v17 = vpop.permute.xlu0 %16
    %vm18 = vcmask 917248
    %19 = vst.msk [vmem:[#allocation0] ss:$8 sm:$0x3] %vm18, %v17
    %s20 = scalar_lea.vmem %s0, 5
    %s21 = smov 3
    %v22 = vld [vmem:[%s20] ss:$8 sm:%s21]
    %23 = vrot.lane.b32.xlu0 %v22, 80
    %v24 = vpop.permute.xlu0 %23
    %vm25 = vcmask 786048
    %26 = vst.msk [vmem:[#allocation0] ss:$8 sm:$0x3] %vm25, %v24
    %s27 = scalar_lea.vmem %s0, 4
    %s28 = smov 3
    %v29 = vld [vmem:[%s27] ss:$8 sm:%s28]
    %30 = vrot.lane.b32.xlu0 %v29, 64
    %v31 = vpop.permute.xlu0 %30
    %vm32 = vcmask 654848
    %33 = vst.msk [vmem:[#allocation0] ss:$8 sm:$0x3] %vm32, %v31
    %s34 = scalar_lea.vmem %s0, 3
    %s35 = smov 3
    %v36 = vld [vmem:[%s34] ss:$8 sm:%s35]
    %37 = vrot.lane.b32.xlu0 %v36, 48
    %v38 = vpop.permute.xlu0 %37
    %vm39 = vcmask 523648
    %40 = vst.msk [vmem:[#allocation0] ss:$8 sm:$0x3] %vm39, %v38
    %s41 = scalar_lea.vmem %s0, 2
    %s42 = smov 3
    %v43 = vld [vmem:[%s41] ss:$8 sm:%s42]
    %44 = vrot.lane.b32.xlu0 %v43, 32
    %v45 = vpop.permute.xlu0 %44
    %vm46 = vcmask 392448
    %47 = vst.msk [vmem:[#allocation0] ss:$8 sm:$0x3] %vm46, %v45
    %s48 = scalar_lea.vmem %s0, 1
    %s49 = smov 3
    %v50 = vld [vmem:[%s48] ss:$8 sm:%s49]
    %51 = vrot.lane.b32.xlu0 %v50, 16
    %v52 = vpop.permute.xlu0 %51
    %vm53 = vcmask 261248
    %54 = vst.msk [vmem:[#allocation0] ss:$8 sm:$0x3] %vm53, %v52
    %s56 = ssub.s32 2, 1
    %v57 = vld [vmem:[#allocation0] sm:%s56]
    %s59 = ssub.s32 2, 1
    %60 = vst [vmem:[%s1] sm:%s59] %v57
    %s61 = scalar_lea.vmem [#allocation0], 8
    %v62 = vld [vmem:[%s61] sm:%s56]
    %s64 = ssub.s32 2, 1
    %s65 = scalar_lea.vmem %s1, 1
    %66 = vst [vmem:[%s65] sm:%s64] %v62

// kernel: model_forward.1
$region0: #{model_forward.1}
  #allocation0 [shape = 'u32[]', space=smem, size = 0x4, offset = 0x4, fixed_abs, tag = 'smem constant byte address 0x4 - core index']
  #allocation1 [shape = 'u32[72,128]{1,0:T(1,128)}', space=vmem, size = 0x9000, scoped, tag = 'internal scratch']
  %s0 = inlined_call_operand.vmem [shape: bf16[160,72], index: 0, kind: input, shape index: {}]
  %s1 = inlined_call_operand.vmem [shape: bf16[3,72,256], index: 1, kind: input, shape index: {}]
  %s2 = inlined_call_operand.vmem [shape: f32[1,256], index: 2, kind: input, shape index: {}]
  %s3 = inlined_call_operand.vmem [shape: bf16[8,144], index: 3, kind: input, shape index: {}]
  %s4 = inlined_call_operand.vmem [shape: bf16[256,128], index: 4, kind: input, shape index: {}]
  %s5 = inlined_call_operand.vmem [shape: f32[1,128], index: 5, kind: input, shape index: {}]
  %s6 = inlined_call_operand.vmem [shape: f32[8,128], index: 6, kind: output, shape index: {}]
  %s7 = sld [smem:[#allocation0]]
  $region34: #{model_forward.1} parent=0
    _
  %s9 = ssub.s32 1, %s7
  %s10 = scalar_select 0, %s9, %s7
  // Predicated region
  $region2: #{model_forward.1} parent=0 // pred_check
    _
  $region3: #{model_forward.1} parent=0 // pred_check_branch
    %12 = sbr.rel (0) target = $region5
  $region4: #{model_forward.1} parent=0 // pred_region
    _
  $region5: #{model_forward.1} parent=0 // pred_fallthru
    _
  // Predicated region
  $region6: #{model_forward.1} parent=0 // pred_check
    _
  $region7: #{model_forward.1} parent=0 // pred_check_branch
    %14 = sbr.rel (0) target = $region9
  $region8: #{model_forward.1} parent=0 // pred_region
    _
  $region9: #{model_forward.1} parent=0 // pred_fallthru
    _
  // Predicated region
  $region10: #{model_forward.1} parent=0 // pred_check
    _
  $region11: #{model_forward.1} parent=0 // pred_check_branch
    %16 = sbr.rel (0) target = $region13
  $region12: #{model_forward.1} parent=0 // pred_region
    _
  $region13: #{model_forward.1} parent=0 // pred_fallthru
    _
  // Predicated region
  $region14: #{model_forward.1} parent=0 // pred_check
    _
  $region15: #{model_forward.1} parent=0 // pred_check_branch
    %18 = sbr.rel (0) target = $region17
  $region16: #{model_forward.1} parent=0 // pred_region
    _
  $region17: #{model_forward.1} parent=0 // pred_fallthru
    _
  // Predicated region
  $region18: #{model_forward.1} parent=0 // pred_check
    _
  $region19: #{model_forward.1} parent=0 // pred_check_branch
    %20 = sbr.rel (0) target = $region21
  $region20: #{model_forward.1} parent=0 // pred_region
    _
  $region21: #{model_forward.1} parent=0 // pred_fallthru
    _
  // Predicated region
  $region22: #{model_forward.1} parent=0 // pred_check
    _
  $region23: #{model_forward.1} parent=0 // pred_check_branch
    %22 = sbr.rel (0) target = $region25
  $region24: #{model_forward.1} parent=0 // pred_region
    _
  $region25: #{model_forward.1} parent=0 // pred_fallthru
    _
  %v24 = vld [vmem:[%s0] sm:$0xf]
  %v25 = vld [vmem:[%s0 + $0x4] sm:$0xf]
  %v26 = vld [vmem:[%s0 + $0x8] sm:$0xf]
  %v27 = vld [vmem:[%s0 + $0xc] sm:$0xf]
  %v28 = vld [vmem:[%s0 + $0x10] sm:$0xf]
  %v29 = vld [vmem:[%s0 + $0x14] sm:$0xf]
  %v30 = vld [vmem:[%s0 + $0x18] sm:$0xf]
  %v31 = vld [vmem:[%s0 + $0x1c] sm:$0xf]
  %v32 = vld [vmem:[%s0 + $0x20] sm:$0xf]
  %v33 = vld [vmem:[%s0 + $0x24] sm:$0xf]
  %v34 = vld [vmem:[%s0 + $0x28] sm:$0xf]
  %v35 = vld [vmem:[%s0 + $0x2c] sm:$0xf]
  %v36 = vld [vmem:[%s0 + $0x30] sm:$0xf]
  %v37 = vld [vmem:[%s0 + $0x34] sm:$0xf]
  %v38 = vld [vmem:[%s0 + $0x38] sm:$0xf]
  %v39 = vld [vmem:[%s0 + $0x3c] sm:$0xf]
  %v40 = vld [vmem:[%s0 + $0x40] sm:$0xf]
  %v41 = vld [vmem:[%s0 + $0x44] sm:$0xf]
  %v42 = vld [vmem:[%s0 + $0x48] sm:$0xf]
  %v43 = vunpack.c.l.bf16 %v24
  %v44 = vunpack.c.l.bf16 %v25
  %v45 = vunpack.c.l.bf16 %v26
  %v46 = vunpack.c.l.bf16 %v27
  %v47 = vunpack.c.l.bf16 %v28
  %v48 = vunpack.c.l.bf16 %v29
  %v49 = vunpack.c.l.bf16 %v30
  %v50 = vunpack.c.l.bf16 %v31
  %v51 = vunpack.c.l.bf16 %v32
  %v52 = vunpack.c.l.bf16 %v33
  %v53 = vunpack.c.l.bf16 %v34
  %v54 = vunpack.c.l.bf16 %v35
  %v55 = vunpack.c.l.bf16 %v36
  %v56 = vunpack.c.l.bf16 %v37
  %v57 = vunpack.c.l.bf16 %v38
  %v58 = vunpack.c.l.bf16 %v39
  %v59 = vunpack.c.l.bf16 %v40
  %v60 = vunpack.c.l.bf16 %v41
  %v61 = vunpack.c.l.bf16 %v42
  %v62 = vpack.c.bf16 %v44, %v43
  %v63 = vpack.c.bf16 %v46, %v45
  %v64 = vpack.c.bf16 %v48, %v47
  %v65 = vpack.c.bf16 %v50, %v49
  %v66 = vpack.c.bf16 %v52, %v51
  %v67 = vpack.c.bf16 %v54, %v53
  %v68 = vpack.c.bf16 %v56, %v55
  %v69 = vpack.c.bf16 %v58, %v57
  %v70 = vpack.c.bf16 %v60, %v59
  %v71 = vld [vmem:[%s1] sm:$0xff]
  %v72 = vld [vmem:[%s1 + $0x8] sm:$0xff]
  %v73 = vld [vmem:[%s1 + $0x10] sm:$0xff]
  %v74 = vld [vmem:[%s1 + $0x18] sm:$0xff]
  %v75 = vld [vmem:[%s1 + $0x20] sm:$0xff]
  %v76 = vld [vmem:[%s1 + $0x28] sm:$0xff]
  %v77 = vld [vmem:[%s1 + $0x30] sm:$0xff]
  %v78 = vld [vmem:[%s1 + $0x38] sm:$0xff]
  %v79 = vld [vmem:[%s1 + $0x40] sm:$0xff]
  %v80 = vpack.c.bf16 %v61, %v61
  %s81 = scalar_lea.vmem %s1, 72
  %v82 = vld [vmem:[%s81] sm:$0xff]
  %v83 = vld [vmem:[%s81 + $0x8] sm:$0xff]
  %v84 = vld [vmem:[%s81 + $0x10] sm:$0xff]
  %v85 = vld [vmem:[%s81 + $0x18] sm:$0xff]
  %v86 = vld [vmem:[%s81 + $0x20] sm:$0xff]
  %v87 = vld [vmem:[%s81 + $0x28] sm:$0xff]
  %v88 = vld [vmem:[%s81 + $0x30] sm:$0xff]
  %v89 = vld [vmem:[%s81 + $0x38] sm:$0xff]
  %v90 = vld [vmem:[%s81 + $0x40] sm:$0xff]
  %vm91 = vsmask.f32 7424
  %v93 = vshrl.u32 %v62, 16
  %v95 = vshll.u32 %v62, 16
  %v97 = vrot.slane %v95, 1
  %v98 = vor.u32 %v93, %v97
  %v100 = vshll.u32 %v63, 16
  %v102 = vrot.slane %v100, 1
  %v103 = vsel %vm91, %v98, %v102
  %v104 = vshrl.u32 %v63, 16
  %v106 = vor.u32 %v104, %v102
  %v108 = vshll.u32 %v64, 16
  %v110 = vrot.slane %v108, 1
  %v111 = vsel %vm91, %v106, %v110
  %v112 = vshrl.u32 %v64, 16
  %v114 = vor.u32 %v112, %v110
  %v116 = vshll.u32 %v65, 16
  %v118 = vrot.slane %v116, 1
  %v119 = vsel %vm91, %v114, %v118
  %v120 = vshrl.u32 %v65, 16
  %v122 = vor.u32 %v120, %v118
  %v124 = vshll.u32 %v66, 16
  %v126 = vrot.slane %v124, 1
  %v127 = vsel %vm91, %v122, %v126
  %v128 = vshrl.u32 %v66, 16
  %v130 = vor.u32 %v128, %v126
  %v132 = vshll.u32 %v67, 16
  %v134 = vrot.slane %v132, 1
  %v135 = vsel %vm91, %v130, %v134
  %v136 = vshrl.u32 %v67, 16
  %v138 = vor.u32 %v136, %v134
  %v140 = vshll.u32 %v68, 16
  %v142 = vrot.slane %v140, 1
  %v143 = vsel %vm91, %v138, %v142
  %v144 = vshrl.u32 %v68, 16
  %v146 = vor.u32 %v144, %v142
  %v148 = vshll.u32 %v69, 16
  %v150 = vrot.slane %v148, 1
  %v151 = vsel %vm91, %v146, %v150
  %v152 = vshrl.u32 %v69, 16
  %v154 = vor.u32 %v152, %v150
  %v156 = vshll.u32 %v70, 16
  %v158 = vrot.slane %v156, 1
  %v159 = vsel %vm91, %v154, %v158
  %v160 = vshrl.u32 %v70, 16
  %v162 = vor.u32 %v160, %v158
  %v164 = vshll.u32 %v80, 16
  %v166 = vrot.slane %v164, 1
  %v167 = vsel %vm91, %v162, %v166
  %v177 = vunpack.c.l.b16 %v82
  %v178 = vunpack.c.h.b16 %v82
  %v179 = vunpack.c.l.b16 %v83
  %v180 = vunpack.c.h.b16 %v83
  %v181 = vunpack.c.l.b16 %v84
  %v182 = vunpack.c.h.b16 %v84
  %v183 = vunpack.c.l.b16 %v85
  %v184 = vunpack.c.h.b16 %v85
  %v185 = vunpack.c.l.b16 %v86
  %v186 = vunpack.c.h.b16 %v86
  %v187 = vunpack.c.l.b16 %v87
  %v188 = vunpack.c.h.b16 %v87
  %v189 = vunpack.c.l.b16 %v88
  %v190 = vunpack.c.h.b16 %v88
  %v191 = vunpack.c.l.b16 %v89
  %v192 = vunpack.c.h.b16 %v89
  %v193 = vunpack.c.l.b16 %v90
  %v194 = vunpack.c.h.b16 %v90
  %v195 = vpack.c.b16 %v179, %v177
  %v196 = vpack.c.b16 %v180, %v178
  %v197 = vpack.c.b16 %v183, %v181
  %v198 = vpack.c.b16 %v184, %v182
  %v199 = vpack.c.b16 %v187, %v185
  %v200 = vpack.c.b16 %v188, %v186
  %v201 = vpack.c.b16 %v191, %v189
  %v202 = vpack.c.b16 %v192, %v190
  %v203 = vpack.c.b16 %v193, %v193
  %v204 = vpack.c.b16 %v194, %v194
  %vm213 = vcmask 588800
  %v215 = vsel %vm213, %v103, 0
  %v218 = vsel %vm213, %v111, 0
  %v221 = vsel %vm213, %v119, 0
  %v224 = vsel %vm213, %v127, 0
  %v227 = vsel %vm213, %v135, 0
  %v230 = vsel %vm213, %v143, 0
  %v233 = vsel %vm213, %v151, 0
  %v236 = vsel %vm213, %v159, 0
  %v239 = vsel %vm213, %v167, 0
  %vm241 = vcmask 1043456
  %v243 = vsel %vm241, %v203, 0
  %v246 = vsel %vm241, %v204, 0
  %248 = vmatpush.bf16.msra.mxu0 0
  %249 = vmatpush.bf16.msra.mxu0 0
  %250 = vmatpush.bf16.msra.mxu0 0
  %251 = vmatpush.bf16.msra.mxu0 %v243
  %252 = vmatpush.bf16.msra.mxu0 %v201
  %253 = vmatpush.bf16.msra.mxu0 %v199
  %254 = vmatpush.bf16.msra.mxu0 %v197
  %255 = vmatpush.bf16.msra.mxu0 %v195
  %256 = vmatmul.bf16.gmra.mxu0 %v215
  %v257 = vpop.f32.mrf.mxu0
  %v258 = vadd.f32 0.0, %v257
  %v259 = vpop.f32.mrf.mxu0
  %v260 = vadd.f32 0.0, %v259
  %261 = vmatmul.bf16.gmra.mxu0 %v218
  %v262 = vpop.f32.mrf.mxu0
  %v263 = vadd.f32 0.0, %v262
  %v264 = vpop.f32.mrf.mxu0
  %v265 = vadd.f32 0.0, %v264
  %266 = vmatmul.bf16.gmra.mxu0 %v221
  %v267 = vpop.f32.mrf.mxu0
  %v268 = vadd.f32 0.0, %v267
  %v269 = vpop.f32.mrf.mxu0
  %v270 = vadd.f32 0.0, %v269
  %271 = vmatmul.bf16.gmra.mxu0 %v224
  %v272 = vpop.f32.mrf.mxu0
  %v273 = vadd.f32 0.0, %v272
  %v274 = vpop.f32.mrf.mxu0
  %v275 = vadd.f32 0.0, %v274
  %276 = vmatmul.bf16.gmra.mxu0 %v227
  %v277 = vpop.f32.mrf.mxu0
  %v278 = vadd.f32 0.0, %v277
  %v279 = vpop.f32.mrf.mxu0
  %v280 = vadd.f32 0.0, %v279
  %281 = vmatmul.bf16.gmra.mxu0 %v230
  %v282 = vpop.f32.mrf.mxu0
  %v283 = vadd.f32 0.0, %v282
  %v284 = vpop.f32.mrf.mxu0
  %v285 = vadd.f32 0.0, %v284
  %286 = vmatmul.bf16.gmra.mxu0 %v233
  %v287 = vpop.f32.mrf.mxu0
  %v288 = vadd.f32 0.0, %v287
  %v289 = vpop.f32.mrf.mxu0
  %v290 = vadd.f32 0.0, %v289
  %291 = vmatmul.bf16.gmra.mxu0 %v236
  %v292 = vpop.f32.mrf.mxu0
  %v293 = vadd.f32 0.0, %v292
  %v294 = vpop.f32.mrf.mxu0
  %v295 = vadd.f32 0.0, %v294
  %296 = vmatmul.bf16.gmra.mxu0 %v239
  %v297 = vpop.f32.mrf.mxu0
  %v298 = vadd.f32 0.0, %v297
  %v299 = vpop.f32.mrf.mxu0
  %v300 = vadd.f32 0.0, %v299
  %301 = vdwg.mxu0
  %302 = vmatpush.bf16.msra.mxu0 0
  %303 = vmatpush.bf16.msra.mxu0 0
  %304 = vmatpush.bf16.msra.mxu0 0
  %305 = vmatpush.bf16.msra.mxu0 %v246
  %306 = vmatpush.bf16.msra.mxu0 %v202
  %307 = vmatpush.bf16.msra.mxu0 %v200
  %308 = vmatpush.bf16.msra.mxu0 %v198
  %309 = vmatpush.bf16.msra.mxu0 %v196
  %310 = vmatmul.bf16.gmra.mxu0 %v215
  %v311 = vpop.f32.mrf.mxu0
  %v312 = vadd.f32 0.0, %v311
  %v313 = vpop.f32.mrf.mxu0
  %v314 = vadd.f32 0.0, %v313
  %315 = vmatmul.bf16.gmra.mxu0 %v218
  %v316 = vpop.f32.mrf.mxu0
  %v317 = vadd.f32 0.0, %v316
  %v318 = vpop.f32.mrf.mxu0
  %v319 = vadd.f32 0.0, %v318
  %320 = vmatmul.bf16.gmra.mxu0 %v221
  %v321 = vpop.f32.mrf.mxu0
  %v322 = vadd.f32 0.0, %v321
  %v323 = vpop.f32.mrf.mxu0
  %v324 = vadd.f32 0.0, %v323
  %325 = vmatmul.bf16.gmra.mxu0 %v224
  %v326 = vpop.f32.mrf.mxu0
  %v327 = vadd.f32 0.0, %v326
  %v328 = vpop.f32.mrf.mxu0
  %v329 = vadd.f32 0.0, %v328
  %330 = vmatmul.bf16.gmra.mxu0 %v227
  %v331 = vpop.f32.mrf.mxu0
  %v332 = vadd.f32 0.0, %v331
  %v333 = vpop.f32.mrf.mxu0
  %v334 = vadd.f32 0.0, %v333
  %335 = vmatmul.bf16.gmra.mxu0 %v230
  %v336 = vpop.f32.mrf.mxu0
  %v337 = vadd.f32 0.0, %v336
  %v338 = vpop.f32.mrf.mxu0
  %v339 = vadd.f32 0.0, %v338
  %340 = vmatmul.bf16.gmra.mxu0 %v233
  %v341 = vpop.f32.mrf.mxu0
  %v342 = vadd.f32 0.0, %v341
  %v343 = vpop.f32.mrf.mxu0
  %v344 = vadd.f32 0.0, %v343
  %345 = vmatmul.bf16.gmra.mxu0 %v236
  %v346 = vpop.f32.mrf.mxu0
  %v347 = vadd.f32 0.0, %v346
  %v348 = vpop.f32.mrf.mxu0
  %v349 = vadd.f32 0.0, %v348
  %350 = vmatmul.bf16.gmra.mxu0 %v239
  %v351 = vpop.f32.mrf.mxu0
  %v352 = vadd.f32 0.0, %v351
  %v353 = vpop.f32.mrf.mxu0
  %v354 = vadd.f32 0.0, %v353
  %355 = vdwg.mxu0
  %v365 = vunpack.c.l.b16 %v71
  %v366 = vunpack.c.h.b16 %v71
  %v367 = vunpack.c.l.b16 %v72
  %v368 = vunpack.c.h.b16 %v72
  %v369 = vunpack.c.l.b16 %v73
  %v370 = vunpack.c.h.b16 %v73
  %v371 = vunpack.c.l.b16 %v74
  %v372 = vunpack.c.h.b16 %v74
  %v373 = vunpack.c.l.b16 %v75
  %v374 = vunpack.c.h.b16 %v75
  %v375 = vunpack.c.l.b16 %v76
  %v376 = vunpack.c.h.b16 %v76
  %v377 = vunpack.c.l.b16 %v77
  %v378 = vunpack.c.h.b16 %v77
  %v379 = vunpack.c.l.b16 %v78
  %v380 = vunpack.c.h.b16 %v78
  %v381 = vunpack.c.l.b16 %v79
  %v382 = vunpack.c.h.b16 %v79
  %v383 = vpack.c.b16 %v367, %v365
  %v384 = vpack.c.b16 %v368, %v366
  %v385 = vpack.c.b16 %v371, %v369
  %v386 = vpack.c.b16 %v372, %v370
  %v387 = vpack.c.b16 %v375, %v373
  %v388 = vpack.c.b16 %v376, %v374
  %v389 = vpack.c.b16 %v379, %v377
  %v390 = vpack.c.b16 %v380, %v378
  %v391 = vpack.c.b16 %v381, %v381
  %v392 = vpack.c.b16 %v382, %v382
  %v401 = vsel %vm213, %v62, 0
  %v403 = vsel %vm213, %v63, 0
  %v405 = vsel %vm213, %v64, 0
  %v407 = vsel %vm213, %v65, 0
  %v409 = vsel %vm213, %v66, 0
  %v411 = vsel %vm213, %v67, 0
  %v413 = vsel %vm213, %v68, 0
  %v415 = vsel %vm213, %v69, 0
  %v417 = vsel %vm213, %v70, 0
  %v420 = vsel %vm241, %v391, 0
  %v423 = vsel %vm241, %v392, 0
  %425 = vmatpush.bf16.msra.mxu0 0
  %426 = vmatpush.bf16.msra.mxu0 0
  %427 = vmatpush.bf16.msra.mxu0 0
  %428 = vmatpush.bf16.msra.mxu0 %v420
  %429 = vmatpush.bf16.msra.mxu0 %v389
  %430 = vmatpush.bf16.msra.mxu0 %v387
  %431 = vmatpush.bf16.msra.mxu0 %v385
  %432 = vmatpush.bf16.msra.mxu0 %v383
  %433 = vmatmul.bf16.gmra.mxu0 %v401
  %v434 = vpop.f32.mrf.mxu0
  %v435 = vadd.f32 %v258, %v434
  %v436 = vpop.f32.mrf.mxu0
  %v437 = vadd.f32 %v260, %v436
  %438 = vmatmul.bf16.gmra.mxu0 %v403
  %v439 = vpop.f32.mrf.mxu0
  %v440 = vadd.f32 %v263, %v439
  %v441 = vpop.f32.mrf.mxu0
  %v442 = vadd.f32 %v265, %v441
  %443 = vmatmul.bf16.gmra.mxu0 %v405
  %v444 = vpop.f32.mrf.mxu0
  %v445 = vadd.f32 %v268, %v444
  %v446 = vpop.f32.mrf.mxu0
  %v447 = vadd.f32 %v270, %v446
  %448 = vmatmul.bf16.gmra.mxu0 %v407
  %v449 = vpop.f32.mrf.mxu0
  %v450 = vadd.f32 %v273, %v449
  %v451 = vpop.f32.mrf.mxu0
  %v452 = vadd.f32 %v275, %v451
  %453 = vmatmul.bf16.gmra.mxu0 %v409
  %v454 = vpop.f32.mrf.mxu0
  %v455 = vadd.f32 %v278, %v454
  %v456 = vpop.f32.mrf.mxu0
  %v457 = vadd.f32 %v280, %v456
  %458 = vmatmul.bf16.gmra.mxu0 %v411
  %v459 = vpop.f32.mrf.mxu0
  %v460 = vadd.f32 %v283, %v459
  %v461 = vpop.f32.mrf.mxu0
  %v462 = vadd.f32 %v285, %v461
  %463 = vmatmul.bf16.gmra.mxu0 %v413
  %v464 = vpop.f32.mrf.mxu0
  %v465 = vadd.f32 %v288, %v464
  %v466 = vpop.f32.mrf.mxu0
  %v467 = vadd.f32 %v290, %v466
  %468 = vmatmul.bf16.gmra.mxu0 %v415
  %v469 = vpop.f32.mrf.mxu0
  %v470 = vadd.f32 %v293, %v469
  %v471 = vpop.f32.mrf.mxu0
  %v472 = vadd.f32 %v295, %v471
  %473 = vmatmul.bf16.gmra.mxu0 %v417
  %v474 = vpop.f32.mrf.mxu0
  %v475 = vadd.f32 %v298, %v474
  %v476 = vpop.f32.mrf.mxu0
  %v477 = vadd.f32 %v300, %v476
  %478 = vdwg.mxu0
  %479 = vmatpush.bf16.msra.mxu0 0
  %480 = vmatpush.bf16.msra.mxu0 0
  %481 = vmatpush.bf16.msra.mxu0 0
  %482 = vmatpush.bf16.msra.mxu0 %v423
  %483 = vmatpush.bf16.msra.mxu0 %v390
  %484 = vmatpush.bf16.msra.mxu0 %v388
  %485 = vmatpush.bf16.msra.mxu0 %v386
  %486 = vmatpush.bf16.msra.mxu0 %v384
  %487 = vmatmul.bf16.gmra.mxu0 %v401
  %v488 = vpop.f32.mrf.mxu0
  %v489 = vadd.f32 %v312, %v488
  %v490 = vpop.f32.mrf.mxu0
  %v491 = vadd.f32 %v314, %v490
  %492 = vmatmul.bf16.gmra.mxu0 %v403
  %v493 = vpop.f32.mrf.mxu0
  %v494 = vadd.f32 %v317, %v493
  %v495 = vpop.f32.mrf.mxu0
  %v496 = vadd.f32 %v319, %v495
  %497 = vmatmul.bf16.gmra.mxu0 %v405
  %v498 = vpop.f32.mrf.mxu0
  %v499 = vadd.f32 %v322, %v498
  %v500 = vpop.f32.mrf.mxu0
  %v501 = vadd.f32 %v324, %v500
  %502 = vmatmul.bf16.gmra.mxu0 %v407
  %v503 = vpop.f32.mrf.mxu0
  %v504 = vadd.f32 %v327, %v503
  %v505 = vpop.f32.mrf.mxu0
  %v506 = vadd.f32 %v329, %v505
  %507 = vmatmul.bf16.gmra.mxu0 %v409
  %v508 = vpop.f32.mrf.mxu0
  %v509 = vadd.f32 %v332, %v508
  %v510 = vpop.f32.mrf.mxu0
  %v511 = vadd.f32 %v334, %v510
  %512 = vmatmul.bf16.gmra.mxu0 %v411
  %v513 = vpop.f32.mrf.mxu0
  %v514 = vadd.f32 %v337, %v513
  %v515 = vpop.f32.mrf.mxu0
  %v516 = vadd.f32 %v339, %v515
  %517 = vmatmul.bf16.gmra.mxu0 %v413
  %v518 = vpop.f32.mrf.mxu0
  %v519 = vadd.f32 %v342, %v518
  %v520 = vpop.f32.mrf.mxu0
  %v521 = vadd.f32 %v344, %v520
  %522 = vmatmul.bf16.gmra.mxu0 %v415
  %v523 = vpop.f32.mrf.mxu0
  %v524 = vadd.f32 %v347, %v523
  %v525 = vpop.f32.mrf.mxu0
  %v526 = vadd.f32 %v349, %v525
  %527 = vmatmul.bf16.gmra.mxu0 %v417
  %v528 = vpop.f32.mrf.mxu0
  %v529 = vadd.f32 %v352, %v528
  %v530 = vpop.f32.mrf.mxu0
  %v531 = vadd.f32 %v354, %v530
  %532 = vdwg.mxu0
  %s533 = scalar_lea.vmem %s1, 144
  %v534 = vld [vmem:[%s533] sm:$0xff]
  %v535 = vld [vmem:[%s533 + $0x8] sm:$0xff]
  %v536 = vld [vmem:[%s533 + $0x10] sm:$0xff]
  %v537 = vld [vmem:[%s533 + $0x18] sm:$0xff]
  %v538 = vld [vmem:[%s533 + $0x20] sm:$0xff]
  %v539 = vld [vmem:[%s533 + $0x28] sm:$0xff]
  %v540 = vld [vmem:[%s533 + $0x30] sm:$0xff]
  %v541 = vld [vmem:[%s533 + $0x38] sm:$0xff]
  %v542 = vld [vmem:[%s533 + $0x40] sm:$0xff]
  %vm553 = vcmask 1046528
  %v554 = vrot.slane %v62, 1
  %v555 = vrot.slane %v63, 1
  %v556 = vsel %vm553, %v554, %v555
  %v557 = vrot.slane %v64, 1
  %v558 = vsel %vm553, %v555, %v557
  %v559 = vrot.slane %v65, 1
  %v560 = vsel %vm553, %v557, %v559
  %v561 = vrot.slane %v66, 1
  %v562 = vsel %vm553, %v559, %v561
  %v563 = vrot.slane %v67, 1
  %v564 = vsel %vm553, %v561, %v563
  %v565 = vrot.slane %v68, 1
  %v566 = vsel %vm553, %v563, %v565
  %v567 = vrot.slane %v69, 1
  %v568 = vsel %vm553, %v565, %v567
  %v569 = vrot.slane %v70, 1
  %v570 = vsel %vm553, %v567, %v569
  %v571 = vrot.slane %v80, 1
  %v572 = vsel %vm553, %v569, %v571
  %v582 = vunpack.c.l.b16 %v534
  %v583 = vunpack.c.h.b16 %v534
  %v584 = vunpack.c.l.b16 %v535
  %v585 = vunpack.c.h.b16 %v535
  %v586 = vunpack.c.l.b16 %v536
  %v587 = vunpack.c.h.b16 %v536
  %v588 = vunpack.c.l.b16 %v537
  %v589 = vunpack.c.h.b16 %v537
  %v590 = vunpack.c.l.b16 %v538
  %v591 = vunpack.c.h.b16 %v538
  %v592 = vunpack.c.l.b16 %v539
  %v593 = vunpack.c.h.b16 %v539
  %v594 = vunpack.c.l.b16 %v540
  %v595 = vunpack.c.h.b16 %v540
  %v596 = vunpack.c.l.b16 %v541
  %v597 = vunpack.c.h.b16 %v541
  %v598 = vunpack.c.l.b16 %v542
  %v599 = vunpack.c.h.b16 %v542
  %v600 = vpack.c.b16 %v584, %v582
  %v601 = vpack.c.b16 %v585, %v583
  %v602 = vpack.c.b16 %v588, %v586
  %v603 = vpack.c.b16 %v589, %v587
  %v604 = vpack.c.b16 %v592, %v590
  %v605 = vpack.c.b16 %v593, %v591
  %v606 = vpack.c.b16 %v596, %v594
  %v607 = vpack.c.b16 %v597, %v595
  %v608 = vpack.c.b16 %v598, %v598
  %v609 = vpack.c.b16 %v599, %v599
  %v619 = vsel %vm213, %v556, 0
  %v622 = vsel %vm213, %v558, 0
  %v625 = vsel %vm213, %v560, 0
  %v628 = vsel %vm213, %v562, 0
  %v631 = vsel %vm213, %v564, 0
  %v634 = vsel %vm213, %v566, 0
  %v637 = vsel %vm213, %v568, 0
  %v640 = vsel %vm213, %v570, 0
  %v643 = vsel %vm213, %v572, 0
  %v646 = vsel %vm241, %v608, 0
  %v649 = vsel %vm241, %v609, 0
  %651 = vmatpush.bf16.msra.mxu0 0
  %652 = vmatpush.bf16.msra.mxu0 0
  %653 = vmatpush.bf16.msra.mxu0 0
  %654 = vmatpush.bf16.msra.mxu0 %v646
  %655 = vmatpush.bf16.msra.mxu0 %v606
  %656 = vmatpush.bf16.msra.mxu0 %v604
  %657 = vmatpush.bf16.msra.mxu0 %v602
  %658 = vmatpush.bf16.msra.mxu0 %v600
  %659 = vmatmul.bf16.gmra.mxu0 %v619
  %v660 = vpop.f32.mrf.mxu0
  %v661 = vadd.f32 0.0, %v660
  %v662 = vpop.f32.mrf.mxu0
  %v663 = vadd.f32 0.0, %v662
  %664 = vmatmul.bf16.gmra.mxu0 %v622
  %v665 = vpop.f32.mrf.mxu0
  %v666 = vadd.f32 0.0, %v665
  %v667 = vpop.f32.mrf.mxu0
  %v668 = vadd.f32 0.0, %v667
  %669 = vmatmul.bf16.gmra.mxu0 %v625
  %v670 = vpop.f32.mrf.mxu0
  %v671 = vadd.f32 0.0, %v670
  %v672 = vpop.f32.mrf.mxu0
  %v673 = vadd.f32 0.0, %v672
  %674 = vmatmul.bf16.gmra.mxu0 %v628
  %v675 = vpop.f32.mrf.mxu0
  %v676 = vadd.f32 0.0, %v675
  %v677 = vpop.f32.mrf.mxu0
  %v678 = vadd.f32 0.0, %v677
  %679 = vmatmul.bf16.gmra.mxu0 %v631
  %v680 = vpop.f32.mrf.mxu0
  %v681 = vadd.f32 0.0, %v680
  %v682 = vpop.f32.mrf.mxu0
  %v683 = vadd.f32 0.0, %v682
  %684 = vmatmul.bf16.gmra.mxu0 %v634
  %v685 = vpop.f32.mrf.mxu0
  %v686 = vadd.f32 0.0, %v685
  %v687 = vpop.f32.mrf.mxu0
  %v688 = vadd.f32 0.0, %v687
  %689 = vmatmul.bf16.gmra.mxu0 %v637
  %v690 = vpop.f32.mrf.mxu0
  %v691 = vadd.f32 0.0, %v690
  %v692 = vpop.f32.mrf.mxu0
  %v693 = vadd.f32 0.0, %v692
  %694 = vmatmul.bf16.gmra.mxu0 %v640
  %v695 = vpop.f32.mrf.mxu0
  %v696 = vadd.f32 0.0, %v695
  %v697 = vpop.f32.mrf.mxu0
  %v698 = vadd.f32 0.0, %v697
  %699 = vmatmul.bf16.gmra.mxu0 %v643
  %v700 = vpop.f32.mrf.mxu0
  %v701 = vadd.f32 0.0, %v700
  %v702 = vpop.f32.mrf.mxu0
  %v703 = vadd.f32 0.0, %v702
  %704 = vdwg.mxu0
  %705 = vmatpush.bf16.msra.mxu0 0
  %706 = vmatpush.bf16.msra.mxu0 0
  %707 = vmatpush.bf16.msra.mxu0 0
  %708 = vmatpush.bf16.msra.mxu0 %v649
  %709 = vmatpush.bf16.msra.mxu0 %v607
  %710 = vmatpush.bf16.msra.mxu0 %v605
  %711 = vmatpush.bf16.msra.mxu0 %v603
  %712 = vmatpush.bf16.msra.mxu0 %v601
  %713 = vmatmul.bf16.gmra.mxu0 %v619
  %v714 = vpop.f32.mrf.mxu0
  %v715 = vadd.f32 0.0, %v714
  %v716 = vpop.f32.mrf.mxu0
  %v717 = vadd.f32 0.0, %v716
  %718 = vmatmul.bf16.gmra.mxu0 %v622
  %v719 = vpop.f32.mrf.mxu0
  %v720 = vadd.f32 0.0, %v719
  %v721 = vpop.f32.mrf.mxu0
  %v722 = vadd.f32 0.0, %v721
  %723 = vmatmul.bf16.gmra.mxu0 %v625
  %v724 = vpop.f32.mrf.mxu0
  %v725 = vadd.f32 0.0, %v724
  %v726 = vpop.f32.mrf.mxu0
  %v727 = vadd.f32 0.0, %v726
  %728 = vmatmul.bf16.gmra.mxu0 %v628
  %v729 = vpop.f32.mrf.mxu0
  %v730 = vadd.f32 0.0, %v729
  %v731 = vpop.f32.mrf.mxu0
  %v732 = vadd.f32 0.0, %v731
  %733 = vmatmul.bf16.gmra.mxu0 %v631
  %v734 = vpop.f32.mrf.mxu0
  %v735 = vadd.f32 0.0, %v734
  %v736 = vpop.f32.mrf.mxu0
  %v737 = vadd.f32 0.0, %v736
  %738 = vmatmul.bf16.gmra.mxu0 %v634
  %v739 = vpop.f32.mrf.mxu0
  %v740 = vadd.f32 0.0, %v739
  %v741 = vpop.f32.mrf.mxu0
  %v742 = vadd.f32 0.0, %v741
  %743 = vmatmul.bf16.gmra.mxu0 %v637
  %v744 = vpop.f32.mrf.mxu0
  %v745 = vadd.f32 0.0, %v744
  %v746 = vpop.f32.mrf.mxu0
  %v747 = vadd.f32 0.0, %v746
  %748 = vmatmul.bf16.gmra.mxu0 %v640
  %v749 = vpop.f32.mrf.mxu0
  %v750 = vadd.f32 0.0, %v749
  %v751 = vpop.f32.mrf.mxu0
  %v752 = vadd.f32 0.0, %v751
  %753 = vmatmul.bf16.gmra.mxu0 %v643
  %v754 = vpop.f32.mrf.mxu0
  %v755 = vadd.f32 0.0, %v754
  %v756 = vpop.f32.mrf.mxu0
  %v757 = vadd.f32 0.0, %v756
  %758 = vdwg.mxu0
  %v759 = vadd.f32 %v435, %v661
  %v760 = vadd.f32 %v489, %v715
  %v761 = vadd.f32 %v437, %v663
  %v762 = vadd.f32 %v491, %v717
  %v763 = vadd.f32 %v440, %v666
  %v764 = vadd.f32 %v494, %v720
  %v765 = vadd.f32 %v442, %v668
  %v766 = vadd.f32 %v496, %v722
  %v767 = vadd.f32 %v445, %v671
  %v768 = vadd.f32 %v499, %v725
  %v769 = vadd.f32 %v447, %v673
  %v770 = vadd.f32 %v501, %v727
  %v771 = vadd.f32 %v450, %v676
  %v772 = vadd.f32 %v504, %v730
  %v773 = vadd.f32 %v452, %v678
  %v774 = vadd.f32 %v506, %v732
  %v775 = vadd.f32 %v455, %v681
  %v776 = vadd.f32 %v509, %v735
  %v777 = vadd.f32 %v457, %v683
  %v778 = vadd.f32 %v511, %v737
  %v779 = vadd.f32 %v460, %v686
  %v780 = vadd.f32 %v514, %v740
  %v781 = vadd.f32 %v462, %v688
  %v782 = vadd.f32 %v516, %v742
  %v783 = vadd.f32 %v465, %v691
  %v784 = vadd.f32 %v519, %v745
  %v785 = vadd.f32 %v467, %v693
  %v786 = vadd.f32 %v521, %v747
  %v787 = vadd.f32 %v470, %v696
  %v788 = vadd.f32 %v524, %v750
  %v789 = vadd.f32 %v472, %v698
  %v790 = vadd.f32 %v526, %v752
  %v791 = vadd.f32 %v475, %v701
  %v792 = vadd.f32 %v529, %v755
  %v793 = vadd.f32 %v477, %v703
  %v794 = vadd.f32 %v531, %v757
  %v795 = vld [vmem:[%s2] sm:$0x3]
  %v797 = vperm.slane %v795, 0
  %v798 = vperm.slane %v795, 1
  %v801 = vadd.f32 %v759, %v797
  %v802 = vadd.f32 %v760, %v798
  %v803 = vadd.f32 %v761, %v797
  %v804 = vadd.f32 %v762, %v798
  %v805 = vadd.f32 %v763, %v797
  %v806 = vadd.f32 %v764, %v798
  %v807 = vadd.f32 %v765, %v797
  %v808 = vadd.f32 %v766, %v798
  %v809 = vadd.f32 %v767, %v797
  %v810 = vadd.f32 %v768, %v798
  %v811 = vadd.f32 %v769, %v797
  %v812 = vadd.f32 %v770, %v798
  %v813 = vadd.f32 %v771, %v797
  %v814 = vadd.f32 %v772, %v798
  %v815 = vadd.f32 %v773, %v797
  %v816 = vadd.f32 %v774, %v798
  %v817 = vadd.f32 %v775, %v797
  %v818 = vadd.f32 %v776, %v798
  %v819 = vadd.f32 %v777, %v797
  %v820 = vadd.f32 %v778, %v798
  %v821 = vadd.f32 %v779, %v797
  %v822 = vadd.f32 %v780, %v798
  %v823 = vadd.f32 %v781, %v797
  %v824 = vadd.f32 %v782, %v798
  %v825 = vadd.f32 %v783, %v797
  %v826 = vadd.f32 %v784, %v798
  %v827 = vadd.f32 %v785, %v797
  %v828 = vadd.f32 %v786, %v798
  %v829 = vadd.f32 %v787, %v797
  %v830 = vadd.f32 %v788, %v798
  %v831 = vadd.f32 %v789, %v797
  %v832 = vadd.f32 %v790, %v798
  %v833 = vadd.f32 %v791, %v797
  %v834 = vadd.f32 %v792, %v798
  %v835 = vadd.f32 %v793, %v797
  %v836 = vadd.f32 %v794, %v798
  %v837 = vmax.f32 %v801, 0.0
  %v838 = vmax.f32 %v802, 0.0
  %v839 = vmax.f32 %v803, 0.0
  %v840 = vmax.f32 %v804, 0.0
  %v841 = vmax.f32 %v805, 0.0
  %v842 = vmax.f32 %v806, 0.0
  %v843 = vmax.f32 %v807, 0.0
  %v844 = vmax.f32 %v808, 0.0
  %v845 = vmax.f32 %v809, 0.0
  %v846 = vmax.f32 %v810, 0.0
  %v847 = vmax.f32 %v811, 0.0
  %v848 = vmax.f32 %v812, 0.0
  %v849 = vmax.f32 %v813, 0.0
  %v850 = vmax.f32 %v814, 0.0
  %v851 = vmax.f32 %v815, 0.0
  %v852 = vmax.f32 %v816, 0.0
  %v853 = vmax.f32 %v817, 0.0
  %v854 = vmax.f32 %v818, 0.0
  %v855 = vmax.f32 %v819, 0.0
  %v856 = vmax.f32 %v820, 0.0
  %v857 = vmax.f32 %v821, 0.0
  %v858 = vmax.f32 %v822, 0.0
  %v859 = vmax.f32 %v823, 0.0
  %v860 = vmax.f32 %v824, 0.0
  %v861 = vmax.f32 %v825, 0.0
  %v862 = vmax.f32 %v826, 0.0
  %v863 = vmax.f32 %v827, 0.0
  %v864 = vmax.f32 %v828, 0.0
  %v865 = vmax.f32 %v829, 0.0
  %v866 = vmax.f32 %v830, 0.0
  %v867 = vmax.f32 %v831, 0.0
  %v868 = vmax.f32 %v832, 0.0
  %v869 = vmax.f32 %v833, 0.0
  %v870 = vmax.f32 %v834, 0.0
  %v871 = vmax.f32 %v835, 0.0
  %v872 = vmax.f32 %v836, 0.0
  %v873 = vld [vmem:[%s3] sm:$0xff]
  %v874 = vpack.c.bf16 %v839, %v837
  %v875 = vpack.c.bf16 %v840, %v838
  %v876 = vpack.c.bf16 %v843, %v841
  %v877 = vpack.c.bf16 %v844, %v842
  %v878 = vpack.c.bf16 %v847, %v845
  %v879 = vpack.c.bf16 %v848, %v846
  %v880 = vpack.c.bf16 %v851, %v849
  %v881 = vpack.c.bf16 %v852, %v850
  %v882 = vpack.c.bf16 %v855, %v853
  %v883 = vpack.c.bf16 %v856, %v854
  %v884 = vpack.c.bf16 %v859, %v857
  %v885 = vpack.c.bf16 %v860, %v858
  %v886 = vpack.c.bf16 %v863, %v861
  %v887 = vpack.c.bf16 %v864, %v862
  %v888 = vpack.c.bf16 %v867, %v865
  %v889 = vpack.c.bf16 %v868, %v866
  %v890 = vpack.c.bf16 %v871, %v869
  %v891 = vpack.c.bf16 %v872, %v870
  %v893 = vunpack.c.l.b16 %v873
  %v894 = vunpack.c.h.b16 %v873
  %v895 = vpack.c.b16 %v893, %v893
  %v896 = vpack.c.b16 %v894, %v894
  %vm898 = vcmask 130048
  %v900 = vsel %vm898, %v896, 0
  %902 = vmatpush.bf16.msra.mxu0 %v888
  %903 = vmatpush.bf16.msra.mxu0 %v886
  %904 = vmatpush.bf16.msra.mxu0 %v884
  %905 = vmatpush.bf16.msra.mxu0 %v882
  %906 = vmatpush.bf16.msra.mxu0 %v880
  %907 = vmatpush.bf16.msra.mxu0 %v878
  %908 = vmatpush.bf16.msra.mxu0 %v876
  %909 = vmatpush.bf16.msra.mxu0 %v874
  %910 = vmatmul.bf16.gmra.mxu0 %v895
  %v911 = vpop.f32.mrf.mxu0
  %v912 = vadd.f32 0.0, %v911
  %v913 = vpop.f32.mrf.mxu0
  %914 = vdwg.mxu0
  %915 = vmatpush.bf16.msra.mxu0 0
  %916 = vmatpush.bf16.msra.mxu0 0
  %917 = vmatpush.bf16.msra.mxu0 0
  %918 = vmatpush.bf16.msra.mxu0 0
  %919 = vmatpush.bf16.msra.mxu0 0
  %920 = vmatpush.bf16.msra.mxu0 0
  %921 = vmatpush.bf16.msra.mxu0 0
  %922 = vmatpush.bf16.msra.mxu0 %v890
  %923 = vmatmul.bf16.gmra.mxu0 %v900
  %v924 = vpop.f32.mrf.mxu0
  %v925 = vadd.f32 %v912, %v924
  %v926 = vpop.f32.mrf.mxu0
  %927 = vdwg.mxu0
  %928 = vmatpush.bf16.msra.mxu0 %v889
  %929 = vmatpush.bf16.msra.mxu0 %v887
  %930 = vmatpush.bf16.msra.mxu0 %v885
  %931 = vmatpush.bf16.msra.mxu0 %v883
  %932 = vmatpush.bf16.msra.mxu0 %v881
  %933 = vmatpush.bf16.msra.mxu0 %v879
  %934 = vmatpush.bf16.msra.mxu0 %v877
  %935 = vmatpush.bf16.msra.mxu0 %v875
  %936 = vmatmul.bf16.gmra.mxu0 %v895
  %v937 = vpop.f32.mrf.mxu0
  %v938 = vadd.f32 0.0, %v937
  %v939 = vpop.f32.mrf.mxu0
  %940 = vdwg.mxu0
  %941 = vmatpush.bf16.msra.mxu0 0
  %942 = vmatpush.bf16.msra.mxu0 0
  %943 = vmatpush.bf16.msra.mxu0 0
  %944 = vmatpush.bf16.msra.mxu0 0
  %945 = vmatpush.bf16.msra.mxu0 0
  %946 = vmatpush.bf16.msra.mxu0 0
  %947 = vmatpush.bf16.msra.mxu0 0
  %948 = vmatpush.bf16.msra.mxu0 %v891
  %949 = vmatmul.bf16.gmra.mxu0 %v900
  %v950 = vpop.f32.mrf.mxu0
  %v951 = vadd.f32 %v938, %v950
  %v952 = vpop.f32.mrf.mxu0
  %953 = vdwg.mxu0
  %v954 = vpack.c.bf16 %v925, %v925
  %v955 = vpack.c.bf16 %v951, %v951
  %v956 = vld [vmem:[%s4] sm:$0xf]
  %v957 = vld [vmem:[%s4 + $0x4] sm:$0xf]
  %v958 = vld [vmem:[%s4 + $0x8] sm:$0xf]
  %v959 = vld [vmem:[%s4 + $0xc] sm:$0xf]
  %v960 = vld [vmem:[%s4 + $0x10] sm:$0xf]
  %v961 = vld [vmem:[%s4 + $0x14] sm:$0xf]
  %v962 = vld [vmem:[%s4 + $0x18] sm:$0xf]
  %v963 = vld [vmem:[%s4 + $0x1c] sm:$0xf]
  %v964 = vld [vmem:[%s4 + $0x20] sm:$0xf]
  %v965 = vld [vmem:[%s4 + $0x24] sm:$0xf]
  %v966 = vld [vmem:[%s4 + $0x28] sm:$0xf]
  %v967 = vld [vmem:[%s4 + $0x2c] sm:$0xf]
  %v968 = vld [vmem:[%s4 + $0x30] sm:$0xf]
  %v969 = vld [vmem:[%s4 + $0x34] sm:$0xf]
  %v970 = vld [vmem:[%s4 + $0x38] sm:$0xf]
  %v971 = vld [vmem:[%s4 + $0x3c] sm:$0xf]
  %v972 = vld [vmem:[%s4 + $0x40] sm:$0xf]
  %v973 = vld [vmem:[%s4 + $0x44] sm:$0xf]
  %v974 = vld [vmem:[%s4 + $0x48] sm:$0xf]
  %v975 = vld [vmem:[%s4 + $0x4c] sm:$0xf]
  %v976 = vld [vmem:[%s4 + $0x50] sm:$0xf]
  %v977 = vld [vmem:[%s4 + $0x54] sm:$0xf]
  %v978 = vld [vmem:[%s4 + $0x58] sm:$0xf]
  %v979 = vld [vmem:[%s4 + $0x5c] sm:$0xf]
  %v980 = vld [vmem:[%s4 + $0x60] sm:$0xf]
  %v981 = vld [vmem:[%s4 + $0x64] sm:$0xf]
  %v982 = vld [vmem:[%s4 + $0x68] sm:$0xf]
  %v983 = vld [vmem:[%s4 + $0x6c] sm:$0xf]
  %v984 = vld [vmem:[%s4 + $0x70] sm:$0xf]
  %v985 = vld [vmem:[%s4 + $0x74] sm:$0xf]
  %v986 = vld [vmem:[%s4 + $0x78] sm:$0xf]
  %v987 = vld [vmem:[%s4 + $0x7c] sm:$0xf]
  %v988 = vld [vmem:[%s5] sm:$0x1]
  %v990 = vperm.slane %v988, 0
  %v1024 = vunpack.c.l.b16 %v956
  %v1025 = vunpack.c.l.b16 %v957
  %v1026 = vunpack.c.l.b16 %v958
  %v1027 = vunpack.c.l.b16 %v959
  %v1028 = vunpack.c.l.b16 %v960
  %v1029 = vunpack.c.l.b16 %v961
  %v1030 = vunpack.c.l.b16 %v962
  %v1031 = vunpack.c.l.b16 %v963
  %v1032 = vunpack.c.l.b16 %v964
  %v1033 = vunpack.c.l.b16 %v965
  %v1034 = vunpack.c.l.b16 %v966
  %v1035 = vunpack.c.l.b16 %v967
  %v1036 = vunpack.c.l.b16 %v968
  %v1037 = vunpack.c.l.b16 %v969
  %v1038 = vunpack.c.l.b16 %v970
  %v1039 = vunpack.c.l.b16 %v971
  %v1040 = vunpack.c.l.b16 %v972
  %v1041 = vunpack.c.l.b16 %v973
  %v1042 = vunpack.c.l.b16 %v974
  %v1043 = vunpack.c.l.b16 %v975
  %v1044 = vunpack.c.l.b16 %v976
  %v1045 = vunpack.c.l.b16 %v977
  %v1046 = vunpack.c.l.b16 %v978
  %v1047 = vunpack.c.l.b16 %v979
  %v1048 = vunpack.c.l.b16 %v980
  %v1049 = vunpack.c.l.b16 %v981
  %v1050 = vunpack.c.l.b16 %v982
  %v1051 = vunpack.c.l.b16 %v983
  %v1052 = vunpack.c.l.b16 %v984
  %v1053 = vunpack.c.l.b16 %v985
  %v1054 = vunpack.c.l.b16 %v986
  %v1055 = vunpack.c.l.b16 %v987
  %v1056 = vpack.c.b16 %v1025, %v1024
  %v1057 = vpack.c.b16 %v1027, %v1026
  %v1058 = vpack.c.b16 %v1029, %v1028
  %v1059 = vpack.c.b16 %v1031, %v1030
  %v1060 = vpack.c.b16 %v1033, %v1032
  %v1061 = vpack.c.b16 %v1035, %v1034
  %v1062 = vpack.c.b16 %v1037, %v1036
  %v1063 = vpack.c.b16 %v1039, %v1038
  %v1064 = vpack.c.b16 %v1041, %v1040
  %v1065 = vpack.c.b16 %v1043, %v1042
  %v1066 = vpack.c.b16 %v1045, %v1044
  %v1067 = vpack.c.b16 %v1047, %v1046
  %v1068 = vpack.c.b16 %v1049, %v1048
  %v1069 = vpack.c.b16 %v1051, %v1050
  %v1070 = vpack.c.b16 %v1053, %v1052
  %v1071 = vpack.c.b16 %v1055, %v1054
  %1088 = vmatpush.bf16.msra.mxu0 %v1063
  %1089 = vmatpush.bf16.msra.mxu0 %v1062
  %1090 = vmatpush.bf16.msra.mxu0 %v1061
  %1091 = vmatpush.bf16.msra.mxu0 %v1060
  %1092 = vmatpush.bf16.msra.mxu0 %v1059
  %1093 = vmatpush.bf16.msra.mxu0 %v1058
  %1094 = vmatpush.bf16.msra.mxu0 %v1057
  %1095 = vmatpush.bf16.msra.mxu0 %v1056
  %1096 = vmatmul.bf16.gmra.mxu0 %v954
  %v1097 = vpop.f32.mrf.mxu0
  %v1098 = vadd.f32 %v990, %v1097
  %v1099 = vpop.f32.mrf.mxu0
  %1100 = vdwg.mxu0
  %1101 = vmatpush.bf16.msra.mxu0 %v1071
  %1102 = vmatpush.bf16.msra.mxu0 %v1070
  %1103 = vmatpush.bf16.msra.mxu0 %v1069
  %1104 = vmatpush.bf16.msra.mxu0 %v1068
  %1105 = vmatpush.bf16.msra.mxu0 %v1067
  %1106 = vmatpush.bf16.msra.mxu0 %v1066
  %1107 = vmatpush.bf16.msra.mxu0 %v1065
  %1108 = vmatpush.bf16.msra.mxu0 %v1064
  %1109 = vmatmul.bf16.gmra.mxu0 %v955
  %v1110 = vpop.f32.mrf.mxu0
  %v1111 = vadd.f32 %v1098, %v1110
  %v1112 = vpop.f32.mrf.mxu0
  %1113 = vdwg.mxu0
  %v1114 = vlaneseq
  %v1115 = vand.u32 %v1114, 127
  %vm1116 = vcmp.lt.s32.totalorder %v1115, 10
  %v1117 = vsel %vm1116, %v1111, -1e+30
  %1118 = vmax.xlane.f32.xlu0 %v1117
  %v1119 = vpop.xlane.xlu0 %1118
  %v1120 = vsub.f32 %v1117, %v1119
  %v1121 = vmul.f32 %v1120, 1.442695
  %v1122 = vpow.pop %v1121
  %1123 = vadd.xlane.f32.xlu0 %v1122
  %v1124 = vpop.xlane.xlu0 %1123
  %v1125 = vlog2.pop %v1124
  %v1126 = vmul.f32 %v1125, 0.6931472
  %v1127 = vsub.f32 %v1120, %v1126
  %1128 = vst [vmem:[%s6] sm:$0xff] %v1127
  // Predicated region
  $region26: #{model_forward.1} parent=0 // pred_check
    _
  $region27: #{model_forward.1} parent=0 // pred_check_branch
    %1130 = sbr.rel (0) target = $region29
  $region28: #{model_forward.1} parent=0 // pred_region
    _
  $region29: #{model_forward.1} parent=0 // pred_fallthru
    _
  // Predicated region
  $region30: #{model_forward.1} parent=0 // pred_check
    _
  $region31: #{model_forward.1} parent=0 // pred_check_branch
    %1132 = sbr.rel (0) target = $region33
  $region32: #{model_forward.1} parent=0 // pred_region
    _
  $region33: #{model_forward.1} parent=0 // pred_fallthru
    _

</llo_original>
